<compile_context>
chip_gen: v7x
topology: tpu7x:2x2x1
jax: 0.10.0
libtpu: 0.0.40
codegen_flags: <defaults>
</compile_context>

<pallas_src>
import functools

import jax
import jax.numpy as jnp
from jax.experimental import pallas as pl
from jax.experimental.pallas import tpu as pltpu

LANE = 128
SUBLANE = 8
# Only split a single-step grid in two (for v7x megacore) if each half tile
# still has >= 1024 rows, so per-step compute keeps amortizing grid overhead.
SPLIT_MIN_BATCH = 2048


def _round_up(x, m):
    return ((x + m - 1) // m) * m


# ---------------------------------------------------------------------------
# Kernel
# ---------------------------------------------------------------------------
def dqn_kernel(action_dim, x_ref, w1_ref, b1_ref, w2_ref, b2_ref, w3_ref,
               b3_ref, o_ref):
    # x tile [TILE_B, state_dim] -> bf16 MXU operand (no-op if already bf16).
    x = x_ref[...]
    if x.dtype != jnp.bfloat16:
        x = x.astype(jnp.bfloat16)
    # fc1 + relu  (f32 accumulation, f32 bias/ReLU)
    h1 = jnp.dot(x, w1_ref[...], preferred_element_type=jnp.float32)
    h1 = jnp.maximum(h1 + b1_ref[...], 0.0)
    # fc2 + relu
    h2 = jnp.dot(h1.astype(jnp.bfloat16), w2_ref[...],
                 preferred_element_type=jnp.float32)
    h2 = jnp.maximum(h2 + b2_ref[...], 0.0)
    # fc3 (no activation); store only the first action_dim lanes (narrow
    # output -> minimal HBM writeback; masked store is fine, MXU/VPU have
    # slack here).
    out = jnp.dot(h2.astype(jnp.bfloat16), w3_ref[...],
                  preferred_element_type=jnp.float32)
    out = out + b3_ref[...]
    o_ref[...] = out[:, :action_dim].astype(o_ref.dtype)


# ---------------------------------------------------------------------------
# Params
# ---------------------------------------------------------------------------
def init_dqn_params(key, state_dim, action_dim, hidden=64):
    """Raw f32 params, PyTorch nn.Linear default init, stored as [in, out]."""
    def linear(k, fan_in, fan_out):
        kw, kb = jax.random.split(k)
        bound = 1.0 / jnp.sqrt(jnp.float32(fan_in))
        w = jax.random.uniform(kw, (fan_in, fan_out), jnp.float32, -bound, bound)
        b = jax.random.uniform(kb, (1, fan_out), jnp.float32, -bound, bound)
        return w, b

    k1, k2, k3 = jax.random.split(key, 3)
    w1, b1 = linear(k1, state_dim, hidden)
    w2, b2 = linear(k2, hidden, hidden)
    w3, b3 = linear(k3, hidden, action_dim)
    return {"w1": w1, "b1": b1, "w2": w2, "b2": b2, "w3": w3, "b3": b3}


def pack_params(raw, param_dtype=jnp.bfloat16):
    """Zero-pad hidden/output dims to 128 lanes; weights -> bf16, biases f32.

    Contraction/hidden padding stays at exactly 128 (ideal for v5e's 128-deep
    MXU; bumping to 256 would only add zero-FLOPs).
    """
    def pad2(a, rows, cols):
        out = jnp.zeros((rows, cols), jnp.float32)
        return out.at[: a.shape[0], : a.shape[1]].set(a)

    state_dim, hidden = raw["w1"].shape
    action_dim = raw["w3"].shape[1]
    hp = _round_up(hidden, LANE)
    np_ = _round_up(action_dim, LANE)
    return {
        "w1": pad2(raw["w1"], state_dim, hp).astype(param_dtype),
        "b1": pad2(raw["b1"], 1, hp),
        "w2": pad2(raw["w2"], hp, hp).astype(param_dtype),
        "b2": pad2(raw["b2"], 1, hp),
        "w3": pad2(raw["w3"], hp, np_).astype(param_dtype),
        "b3": pad2(raw["b3"], 1, np_),
    }


# ---------------------------------------------------------------------------
# Wrapper
# ---------------------------------------------------------------------------
def dqn_forward(x, packed, action_dim, *, tile_b=4096):
    """x: [B, state_dim] f32 (or bf16). packed: padded params from pack_params()."""
    B, state_dim = x.shape
    w1, b1 = packed["w1"], packed["b1"]
    w2, b2 = packed["w2"], packed["b2"]
    w3, b3 = packed["w3"], packed["b3"]
    assert w1.shape[0] == state_dim
    assert w3.shape[1] >= action_dim

    # Batch tile: multiple of 8 (sublane), clamped to the (sublane-rounded)
    # batch.  If a single tile would cover the whole (large) batch, cap it at
    # half so the grid has >=2 "parallel" steps for v7x's two TensorCores.
    b_sub = _round_up(B, SUBLANE)
    tb = min(tile_b, b_sub)
    if tb >= b_sub and b_sub >= SPLIT_MIN_BATCH:
        tb = _round_up(pl.cdiv(b_sub, 2), SUBLANE)
    tb = max(SUBLANE, _round_up(min(tb, b_sub), SUBLANE))

    b_pad = _round_up(B, tb)
    if b_pad != B:
        x = jnp.pad(x, ((0, b_pad - B), (0, 0)))
    grid = (b_pad // tb,)

    flops = 2 * b_pad * (state_dim * w1.shape[1]
                         + w2.shape[0] * w2.shape[1]
                         + w3.shape[0] * w3.shape[1])
    bytes_accessed = (b_pad * state_dim * x.dtype.itemsize
                      + sum(p.size * p.dtype.itemsize for p in packed.values())
                      + b_pad * action_dim * 4)            # narrow f32 output

    kernel = functools.partial(dqn_kernel, action_dim)

    out = pl.pallas_call(
        kernel,
        out_shape=jax.ShapeDtypeStruct((b_pad, action_dim), jnp.float32),
        grid=grid,
        in_specs=[
            pl.BlockSpec((tb, state_dim), lambda i: (i, 0)),  # x: streamed tiles
            pl.BlockSpec(w1.shape, lambda i: (0, 0)),         # weights/biases:
            pl.BlockSpec(b1.shape, lambda i: (0, 0)),          #   constant block
            pl.BlockSpec(w2.shape, lambda i: (0, 0)),          #   index -> stay
            pl.BlockSpec(b2.shape, lambda i: (0, 0)),          #   resident, no
            pl.BlockSpec(w3.shape, lambda i: (0, 0)),          #   re-DMA
            pl.BlockSpec(b3.shape, lambda i: (0, 0)),
        ],
        # Narrow output block: last dim == full array dim (legal), first dim
        # is a sublane multiple.
        out_specs=pl.BlockSpec((tb, action_dim), lambda i: (i, 0)),
        compiler_params=pltpu.CompilerParams(
            dimension_semantics=("parallel",),       # shard batch across TCs
            vmem_limit_bytes=32 * 1024 * 1024,       # safe on v5e/v6e/v7x
        ),
        cost_estimate=pl.CostEstimate(
            flops=flops, transcendentals=0, bytes_accessed=bytes_accessed),
    )(x, w1, b1, w2, b2, w3, b3)

    # Only a cheap row slice remains, and only if the batch had to be padded.
    if b_pad != B:
        out = out[:B]
    return out


# ---------------------------------------------------------------------------
# References
# ---------------------------------------------------------------------------
def dqn_reference(x, p):
    h1 = jax.nn.relu(x @ p["w1"] + p["b1"])
    h2 = jax.nn.relu(h1 @ p["w2"] + p["b2"])
    return h2 @ p["w3"] + p["b3"]


def dqn_reference_bf16(x, p):
    def dot(a, b):
        return jnp.dot(a.astype(jnp.bfloat16), b.astype(jnp.bfloat16),
                       preferred_element_type=jnp.float32)
    h1 = jax.nn.relu(dot(x, p["w1"]) + p["b1"])
    h2 = jax.nn.relu(dot(h1, p["w2"]) + p["b2"])
    return dot(h2, p["w3"]) + p["b3"]


if __name__ == "__main__":
    key = jax.random.PRNGKey(0)
    kx, kp = jax.random.split(key)

    batch, state_dim, action_dim = 64, 8, 4
    x = jax.random.normal(kx, (batch, state_dim), jnp.float32)
    raw = init_dqn_params(kp, state_dim, action_dim)
    packed = pack_params(raw)

    # tile_b=16 -> grid of 4 steps, exercises the pipelined batch grid and the
    # narrow masked-store output path.
    out = dqn_forward(x, packed, action_dim, tile_b=16)
    out = jax.block_until_ready(out)
    assert out.shape == (batch, action_dim)

    # Also exercise the default (single-step / auto-tile) path.
    out_default = jax.block_until_ready(dqn_forward(x, packed, action_dim))
    assert out_default.shape == (batch, action_dim)
    assert jnp.allclose(out, out_default, atol=1e-6, rtol=1e-6)

    # Loose check vs f32 reference (bf16 MXU operands).
    ref_f32 = dqn_reference(x, raw)
    assert jnp.allclose(out, ref_f32, atol=5e-2, rtol=5e-2)

    # Tight check vs matched-precision (bf16 operand, f32 accum) reference.
    ref_bf16 = dqn_reference_bf16(x, raw)
    assert jnp.allclose(out, ref_bf16, atol=2e-3, rtol=2e-3)

    print("KERNEL_OK")
</pallas_src>

<mosaic_0001>
module attributes {stable_mosaic.version = 11 : i64} {
  func.func @dqn_kernel(%arg0: i32, %arg1: memref<16x8xf32, #tpu.memory_space<vmem>>, %arg2: memref<8x128xbf16, #tpu.memory_space<vmem>>, %arg3: memref<1x128xf32, #tpu.memory_space<vmem>>, %arg4: memref<128x128xbf16, #tpu.memory_space<vmem>>, %arg5: memref<1x128xf32, #tpu.memory_space<vmem>>, %arg6: memref<128x128xbf16, #tpu.memory_space<vmem>>, %arg7: memref<1x128xf32, #tpu.memory_space<vmem>>, %arg8: memref<16x4xf32, #tpu.memory_space<vmem>>) attributes {dimension_semantics = [#tpu.dimension_semantics<parallel>], iteration_bounds = array<i64: 4>, scalar_prefetch = 0 : i64, scratch_operands = 0 : i64, tpu.core_type = #tpu.core_type<tc>, window_params = [{transform_indices = @transform_0, window_bounds = array<i64: 16, 8>}, {pipeline_mode = #tpu.pipeline_mode<synchronous>, transform_indices = @transform_1, window_bounds = array<i64: 8, 128>}, {pipeline_mode = #tpu.pipeline_mode<synchronous>, transform_indices = @transform_2, window_bounds = array<i64: 1, 128>}, {pipeline_mode = #tpu.pipeline_mode<synchronous>, transform_indices = @transform_3, window_bounds = array<i64: 128, 128>}, {pipeline_mode = #tpu.pipeline_mode<synchronous>, transform_indices = @transform_4, window_bounds = array<i64: 1, 128>}, {pipeline_mode = #tpu.pipeline_mode<synchronous>, transform_indices = @transform_5, window_bounds = array<i64: 128, 128>}, {pipeline_mode = #tpu.pipeline_mode<synchronous>, transform_indices = @transform_6, window_bounds = array<i64: 1, 128>}, {transform_indices = @transform_7, window_bounds = array<i64: 16, 4>}]} {
    %c0 = arith.constant 0 : index
    %c0_0 = arith.constant 0 : index
    %0 = vector.load %arg1[%c0, %c0_0] : memref<16x8xf32, #tpu.memory_space<vmem>>, vector<16x8xf32>
    %1 = arith.truncf %0 : vector<16x8xf32> to vector<16x8xbf16>
    %c0_1 = arith.constant 0 : index
    %c0_2 = arith.constant 0 : index
    %2 = vector.load %arg2[%c0_1, %c0_2] : memref<8x128xbf16, #tpu.memory_space<vmem>>, vector<8x128xbf16>
    %cst = arith.constant dense<0.000000e+00> : vector<16x128xf32>
    %3 = tpu.matmul %1, %2, %cst {dimension_numbers = #tpu.dot_dimension_numbers<[1], [0], [0], [1], [0, 0, 1, 1], [], []>} : vector<16x8xbf16>, vector<8x128xbf16>, vector<16x128xf32> -> vector<16x128xf32>
    %c0_3 = arith.constant 0 : index
    %c0_4 = arith.constant 0 : index
    %4 = vector.load %arg3[%c0_3, %c0_4] : memref<1x128xf32, #tpu.memory_space<vmem>>, vector<1x128xf32>
    %5 = vector.broadcast %4 : vector<1x128xf32> to vector<16x128xf32>
    %6 = arith.addf %3, %5 : vector<16x128xf32>
    %cst_5 = arith.constant 0.000000e+00 : f32
    %7 = vector.broadcast %cst_5 : f32 to vector<16x128xf32>
    %8 = arith.maximumf %6, %7 : vector<16x128xf32>
    %9 = arith.truncf %8 : vector<16x128xf32> to vector<16x128xbf16>
    %c0_6 = arith.constant 0 : index
    %c0_7 = arith.constant 0 : index
    %10 = vector.load %arg4[%c0_6, %c0_7] : memref<128x128xbf16, #tpu.memory_space<vmem>>, vector<128x128xbf16>
    %cst_8 = arith.constant dense<0.000000e+00> : vector<16x128xf32>
    %11 = tpu.matmul %9, %10, %cst_8 {dimension_numbers = #tpu.dot_dimension_numbers<[1], [0], [0], [1], [0, 0, 1, 1], [], []>} : vector<16x128xbf16>, vector<128x128xbf16>, vector<16x128xf32> -> vector<16x128xf32>
    %c0_9 = arith.constant 0 : index
    %c0_10 = arith.constant 0 : index
    %12 = vector.load %arg5[%c0_9, %c0_10] : memref<1x128xf32, #tpu.memory_space<vmem>>, vector<1x128xf32>
    %13 = vector.broadcast %12 : vector<1x128xf32> to vector<16x128xf32>
    %14 = arith.addf %11, %13 : vector<16x128xf32>
    %cst_11 = arith.constant 0.000000e+00 : f32
    %15 = vector.broadcast %cst_11 : f32 to vector<16x128xf32>
    %16 = arith.maximumf %14, %15 : vector<16x128xf32>
    %17 = arith.truncf %16 : vector<16x128xf32> to vector<16x128xbf16>
    %c0_12 = arith.constant 0 : index
    %c0_13 = arith.constant 0 : index
    %18 = vector.load %arg6[%c0_12, %c0_13] : memref<128x128xbf16, #tpu.memory_space<vmem>>, vector<128x128xbf16>
    %cst_14 = arith.constant dense<0.000000e+00> : vector<16x128xf32>
    %19 = tpu.matmul %17, %18, %cst_14 {dimension_numbers = #tpu.dot_dimension_numbers<[1], [0], [0], [1], [0, 0, 1, 1], [], []>} : vector<16x128xbf16>, vector<128x128xbf16>, vector<16x128xf32> -> vector<16x128xf32>
    %c0_15 = arith.constant 0 : index
    %c0_16 = arith.constant 0 : index
    %20 = vector.load %arg7[%c0_15, %c0_16] : memref<1x128xf32, #tpu.memory_space<vmem>>, vector<1x128xf32>
    %21 = vector.broadcast %20 : vector<1x128xf32> to vector<16x128xf32>
    %22 = arith.addf %19, %21 : vector<16x128xf32>
    %23 = vector.extract_strided_slice %22 {offsets = [0, 0], sizes = [16, 4], strides = [1, 1]} : vector<16x128xf32> to vector<16x4xf32>
    %c0_17 = arith.constant 0 : index
    %c0_18 = arith.constant 0 : index
    %24 = vector.load %arg8[%c0_17, %c0_18] : memref<16x4xf32, #tpu.memory_space<vmem>>, vector<16x4xf32>
    tpu.vector_store %arg8[%c0_17, %c0_18], %23 {strides = array<i32>} : memref<16x4xf32, #tpu.memory_space<vmem>>, vector<16x4xf32>,
    return
  }
  func.func @transform_0(%arg0: i32) -> (i32, i32) {
    %c0_i32 = arith.constant 0 : i32
    %c0_i32_0 = arith.constant 0 : i32
    return %arg0, %c0_i32 : i32, i32
  }
  func.func @transform_1(%arg0: i32) -> (i32, i32) {
    %c0_i32 = arith.constant 0 : i32
    %c0_i32_0 = arith.constant 0 : i32
    %c0_i32_1 = arith.constant 0 : i32
    return %c0_i32, %c0_i32_0 : i32, i32
  }
  func.func @transform_2(%arg0: i32) -> (i32, i32) {
    %c0_i32 = arith.constant 0 : i32
    %c0_i32_0 = arith.constant 0 : i32
    %c0_i32_1 = arith.constant 0 : i32
    return %c0_i32, %c0_i32_0 : i32, i32
  }
  func.func @transform_3(%arg0: i32) -> (i32, i32) {
    %c0_i32 = arith.constant 0 : i32
    %c0_i32_0 = arith.constant 0 : i32
    %c0_i32_1 = arith.constant 0 : i32
    return %c0_i32, %c0_i32_0 : i32, i32
  }
  func.func @transform_4(%arg0: i32) -> (i32, i32) {
    %c0_i32 = arith.constant 0 : i32
    %c0_i32_0 = arith.constant 0 : i32
    %c0_i32_1 = arith.constant 0 : i32
    return %c0_i32, %c0_i32_0 : i32, i32
  }
  func.func @transform_5(%arg0: i32) -> (i32, i32) {
    %c0_i32 = arith.constant 0 : i32
    %c0_i32_0 = arith.constant 0 : i32
    %c0_i32_1 = arith.constant 0 : i32
    return %c0_i32, %c0_i32_0 : i32, i32
  }
  func.func @transform_6(%arg0: i32) -> (i32, i32) {
    %c0_i32 = arith.constant 0 : i32
    %c0_i32_0 = arith.constant 0 : i32
    %c0_i32_1 = arith.constant 0 : i32
    return %c0_i32, %c0_i32_0 : i32, i32
  }
  func.func @transform_7(%arg0: i32) -> (i32, i32) {
    %c0_i32 = arith.constant 0 : i32
    %c0_i32_0 = arith.constant 0 : i32
    return %arg0, %c0_i32 : i32, i32
  }
}

</mosaic_0001>

<llo_original>
// kernel: tpu_custom_call.1
$region0: #{tpu_custom_call.1}
  #allocation0 [shape = 'u32[]', space=smem, size = 0x4, offset = 0x4, fixed_abs, tag = 'smem constant byte address 0x4 - core index']
  #allocation1 [shape = 'u32[144,128]{1,0:T(1,128)}', space=vmem, size = 0x12000, scoped, tag = 'internal scratch']
  %s0 = inlined_call_operand.vmem [shape: f32[64,8], index: 0, kind: input, shape index: {}]
  %s1 = inlined_call_operand.vmem [shape: bf16[8,128], index: 1, kind: input, shape index: {}]
  %s2 = inlined_call_operand.vmem [shape: f32[1,128], index: 2, kind: input, shape index: {}]
  %s3 = inlined_call_operand.vmem [shape: bf16[128,128], index: 3, kind: input, shape index: {}]
  %s4 = inlined_call_operand.vmem [shape: f32[1,128], index: 4, kind: input, shape index: {}]
  %s5 = inlined_call_operand.hbm [shape: bf16[128,128], index: 5, kind: input, shape index: {}]
  %s6 = inlined_call_operand.vmem [shape: f32[1,128], index: 6, kind: input, shape index: {}]
  %s7 = inlined_call_operand.vmem [shape: f32[64,4], index: 7, kind: output, shape index: {}]
  %s8 = sld [smem:[#allocation0]]
  $region65: #{tpu_custom_call.1} parent=0
    _
  %s10 = ssub.s32 1, %s8
  %s11 = scalar_select 0, %s10, %s8
  $region1: #{tpu_custom_call.1} parent=0
    #allocation2 [shape = 'u8[32768]{0}', space=vmem, size = 0x8000, scoped, tag = 'input window, operand 5, single buffered']
    #allocation3 [shape = 's32[2]{0}', space=sflag, size = 0x8, scoped, tag = 'scoped memory for tpu_custom_call.1']
    %12 = vsyncpa [#allocation3], 0
    loop: start=0, step=1, limit=6
    $region2: #{tpu_custom_call.1} parent=1 // loop_pre_header
      _
    $region3: #{tpu_custom_call.1} parent=1 // loop_header
      %s14 = sphi 0, %s18
      %p15 = scmp.ge.s32.totalorder %s14, 6
      %s24 = sphi 0, %s26
      %s27 = sphi 0, %s24
      %s28 = sphi 0, %s27
      %s44 = sphi 0, %s28
      %s48 = sphi 0, %s48
      %s50 = sphi 0, %s48
      %s51 = sphi 0, %s50
      %s65 = sphi 0, %s51
      %s69 = sphi 0, %s69
      %s71 = sphi 0, %s69
      %s72 = sphi 0, %s71
      %s86 = sphi 0, %s72
      %s90 = sphi 0, %s90
      %s92 = sphi 0, %s90
      %s93 = sphi 0, %s92
      %s107 = sphi 0, %s93
      %s111 = sphi 0, %s111
      %s113 = sphi 0, %s111
      %s114 = sphi 0, %s113
      %s128 = sphi 0, %s114
      %s132 = sphi 0, %s132
      %s134 = sphi 0, %s132
      %s135 = sphi 0, %s134
      %s149 = sphi 0, %s135
      %s153 = sphi 0, %s153
      %s155 = sphi 0, %s153
      %s156 = sphi 0, %s155
      %s170 = sphi 0, %s156
      %s176 = sphi 0, %s178
      %s179 = sphi 0, %s176
      %s180 = sphi 0, %s179
      %s196 = sphi 0, %s180
    $region4: #{tpu_custom_call.1} parent=1 // loop_header_branch
      %17 = sbr.rel (%p15) target = $region8
    $region5: #{tpu_custom_call.1} parent=1 // loop_body
      %s19 = ssub.s32 %s14, 1
      %s20 = ssub.s32 %s14, 2
      %s21 = sadd.s32 %s14, 1
      %s22 = ssub.s32 %s14, %s21
      %p23 = scmp.eq.s32.totalorder %s22, 0
      %s25 = sadd.s32 %s24, 1
      %s26 = scalar_select %p23, %s24, %s25
      %p29 = pneg %p23
      %p30 = scmp.eq.s32.totalorder %s14, 3
      %p31 = por %p29, %p30
      %p32 = scmp.ne.s32.totalorder %s24, %s27
      %p33 = scmp.eq.s32.totalorder %s14, 0
      %p34 = por %p32, %p33
      %p35 = scmp.ne.s32.totalorder %s24, %s27
      %p36 = scmp.eq.s32.totalorder %s19, 3
      %p37 = por %p35, %p36
      %p38 = scmp.ne.s32.totalorder %s27, %s28
      %p39 = scmp.eq.s32.totalorder %s19, 0
      %p40 = por %p38, %p39
      %p41 = scmp.ne.s32.totalorder %s27, %s28
      %p42 = scmp.eq.s32.totalorder %s20, 3
      %p43 = por %p41, %p42
      %p45 = scmp.ne.s32.totalorder %s28, %s44
      %p46 = scmp.eq.s32.totalorder %s20, 0
      %p47 = por %p45, %p46
      %s49 = sadd.s32 %s48, 1
      %p52 = scmp.eq.s32.totalorder %s14, 3
      %p53 = scmp.ne.s32.totalorder %s48, %s50
      %p54 = scmp.eq.s32.totalorder %s14, 0
      %p55 = por %p53, %p54
      %p56 = scmp.ne.s32.totalorder %s48, %s50
      %p57 = scmp.eq.s32.totalorder %s19, 3
      %p58 = por %p56, %p57
      %p59 = scmp.ne.s32.totalorder %s50, %s51
      %p60 = scmp.eq.s32.totalorder %s19, 0
      %p61 = por %p59, %p60
      %p62 = scmp.ne.s32.totalorder %s50, %s51
      %p63 = scmp.eq.s32.totalorder %s20, 3
      %p64 = por %p62, %p63
      %p66 = scmp.ne.s32.totalorder %s51, %s65
      %p67 = scmp.eq.s32.totalorder %s20, 0
      %p68 = por %p66, %p67
      %s70 = sadd.s32 %s69, 1
      %p73 = scmp.eq.s32.totalorder %s14, 3
      %p74 = scmp.ne.s32.totalorder %s69, %s71
      %p75 = scmp.eq.s32.totalorder %s14, 0
      %p76 = por %p74, %p75
      %p77 = scmp.ne.s32.totalorder %s69, %s71
      %p78 = scmp.eq.s32.totalorder %s19, 3
      %p79 = por %p77, %p78
      %p80 = scmp.ne.s32.totalorder %s71, %s72
      %p81 = scmp.eq.s32.totalorder %s19, 0
      %p82 = por %p80, %p81
      %p83 = scmp.ne.s32.totalorder %s71, %s72
      %p84 = scmp.eq.s32.totalorder %s20, 3
      %p85 = por %p83, %p84
      %p87 = scmp.ne.s32.totalorder %s72, %s86
      %p88 = scmp.eq.s32.totalorder %s20, 0
      %p89 = por %p87, %p88
      %s91 = sadd.s32 %s90, 1
      %p94 = scmp.eq.s32.totalorder %s14, 3
      %p95 = scmp.ne.s32.totalorder %s90, %s92
      %p96 = scmp.eq.s32.totalorder %s14, 0
      %p97 = por %p95, %p96
      %p98 = scmp.ne.s32.totalorder %s90, %s92
      %p99 = scmp.eq.s32.totalorder %s19, 3
      %p100 = por %p98, %p99
      %p101 = scmp.ne.s32.totalorder %s92, %s93
      %p102 = scmp.eq.s32.totalorder %s19, 0
      %p103 = por %p101, %p102
      %p104 = scmp.ne.s32.totalorder %s92, %s93
      %p105 = scmp.eq.s32.totalorder %s20, 3
      %p106 = por %p104, %p105
      %p108 = scmp.ne.s32.totalorder %s93, %s107
      %p109 = scmp.eq.s32.totalorder %s20, 0
      %p110 = por %p108, %p109
      %s112 = sadd.s32 %s111, 1
      %p115 = scmp.eq.s32.totalorder %s14, 3
      %p116 = scmp.ne.s32.totalorder %s111, %s113
      %p117 = scmp.eq.s32.totalorder %s14, 0
      %p118 = por %p116, %p117
      %p119 = scmp.ne.s32.totalorder %s111, %s113
      %p120 = scmp.eq.s32.totalorder %s19, 3
      %p121 = por %p119, %p120
      %p122 = scmp.ne.s32.totalorder %s113, %s114
      %p123 = scmp.eq.s32.totalorder %s19, 0
      %p124 = por %p122, %p123
      %p125 = scmp.ne.s32.totalorder %s113, %s114
      %p126 = scmp.eq.s32.totalorder %s20, 3
      %p127 = por %p125, %p126
      %p129 = scmp.ne.s32.totalorder %s114, %s128
      %p130 = scmp.eq.s32.totalorder %s20, 0
      %p131 = por %p129, %p130
      %s133 = sadd.s32 %s132, 1
      %p136 = scmp.eq.s32.totalorder %s14, 3
      %p137 = scmp.ne.s32.totalorder %s132, %s134
      %p138 = scmp.eq.s32.totalorder %s14, 0
      %p139 = por %p137, %p138
      %p140 = scmp.ne.s32.totalorder %s132, %s134
      %p141 = scmp.eq.s32.totalorder %s19, 3
      %p142 = por %p140, %p141
      %p143 = scmp.ne.s32.totalorder %s134, %s135
      %p144 = scmp.eq.s32.totalorder %s19, 0
      %p145 = por %p143, %p144
      %p146 = scmp.ne.s32.totalorder %s134, %s135
      %p147 = scmp.eq.s32.totalorder %s20, 3
      %p148 = por %p146, %p147
      %p150 = scmp.ne.s32.totalorder %s135, %s149
      %p151 = scmp.eq.s32.totalorder %s20, 0
      %p152 = por %p150, %p151
      %s154 = sadd.s32 %s153, 1
      %p157 = scmp.eq.s32.totalorder %s14, 3
      %p158 = scmp.ne.s32.totalorder %s153, %s155
      %p159 = scmp.eq.s32.totalorder %s14, 0
      %p160 = por %p158, %p159
      %p161 = scmp.ne.s32.totalorder %s153, %s155
      %p162 = scmp.eq.s32.totalorder %s19, 3
      %p163 = por %p161, %p162
      %p164 = scmp.ne.s32.totalorder %s155, %s156
      %p165 = scmp.eq.s32.totalorder %s19, 0
      %p166 = por %p164, %p165
      %p167 = scmp.ne.s32.totalorder %s155, %s156
      %p168 = scmp.eq.s32.totalorder %s20, 3
      %p169 = por %p167, %p168
      %p171 = scmp.ne.s32.totalorder %s156, %s170
      %p172 = scmp.eq.s32.totalorder %s20, 0
      %p173 = por %p171, %p172
      %s174 = ssub.s32 %s14, %s21
      %p175 = scmp.eq.s32.totalorder %s174, 0
      %s177 = sadd.s32 %s176, 1
      %s178 = scalar_select %p175, %s176, %s177
      %p181 = pneg %p175
      %p182 = scmp.eq.s32.totalorder %s14, 3
      %p183 = por %p181, %p182
      %p184 = scmp.ne.s32.totalorder %s176, %s179
      %p185 = scmp.eq.s32.totalorder %s14, 0
      %p186 = por %p184, %p185
      %p187 = scmp.ne.s32.totalorder %s176, %s179
      %p188 = scmp.eq.s32.totalorder %s19, 3
      %p189 = por %p187, %p188
      %p190 = scmp.ne.s32.totalorder %s179, %s180
      %p191 = scmp.eq.s32.totalorder %s19, 0
      %p192 = por %p190, %p191
      %p193 = scmp.ne.s32.totalorder %s179, %s180
      %p194 = scmp.eq.s32.totalorder %s20, 3
      %p195 = por %p193, %p194
      %p197 = scmp.ne.s32.totalorder %s180, %s196
      %p198 = scmp.eq.s32.totalorder %s20, 0
      %p199 = por %p197, %p198
      %p200 = scmp.le.s32.totalorder 1, %s14
      %p201 = scmp.lt.s32.totalorder %s14, 5
      %p202 = pnand %p200, %p201
      %p203 = pneg %p202
      // Predicated region
      $region9: #{tpu_custom_call.1} parent=5 // pred_check
        _
      $region10: #{tpu_custom_call.1} parent=5 // pred_check_branch
        %205 = sbr.rel (%p202) target = $region12
      $region11: #{tpu_custom_call.1} parent=5 // pred_region
        %s206 = ssub.s32 %s14, 1
        // Predicated region
        $region13: #{tpu_custom_call.1} parent=11 // pred_check
          %p207 = pneg %p61
        $region14: #{tpu_custom_call.1} parent=11 // pred_check_branch
          %209 = sbr.rel (%p207) target = $region16
        $region15: #{tpu_custom_call.1} parent=11 // pred_region
          _
        $region16: #{tpu_custom_call.1} parent=11 // pred_fallthru
          _
        // Predicated region
        $region17: #{tpu_custom_call.1} parent=11 // pred_check
          %p210 = pneg %p82
        $region18: #{tpu_custom_call.1} parent=11 // pred_check_branch
          %212 = sbr.rel (%p210) target = $region20
        $region19: #{tpu_custom_call.1} parent=11 // pred_region
          _
        $region20: #{tpu_custom_call.1} parent=11 // pred_fallthru
          _
        // Predicated region
        $region21: #{tpu_custom_call.1} parent=11 // pred_check
          %p213 = pneg %p103
        $region22: #{tpu_custom_call.1} parent=11 // pred_check_branch
          %215 = sbr.rel (%p213) target = $region24
        $region23: #{tpu_custom_call.1} parent=11 // pred_region
          _
        $region24: #{tpu_custom_call.1} parent=11 // pred_fallthru
          _
        // Predicated region
        $region25: #{tpu_custom_call.1} parent=11 // pred_check
          %p216 = pneg %p124
        $region26: #{tpu_custom_call.1} parent=11 // pred_check_branch
          %218 = sbr.rel (%p216) target = $region28
        $region27: #{tpu_custom_call.1} parent=11 // pred_region
          _
        $region28: #{tpu_custom_call.1} parent=11 // pred_fallthru
          _
        // Predicated region
        $region29: #{tpu_custom_call.1} parent=11 // pred_check
          %p219 = pneg %p145
        $region30: #{tpu_custom_call.1} parent=11 // pred_check_branch
          %221 = sbr.rel (%p219) target = $region32
        $region31: #{tpu_custom_call.1} parent=11 // pred_region
          %s223 = ssub.s32 1024, 1024
          %224 = vsyncadd [#allocation3], %s223
          %s225 = sshll.u32 [#allocation2], 4
          %s226 = int_to_ptr.vmem [resolvable:$true] %s225
          %231 = dma.hbm_to_vmem [thread:$0]  %s5, 1024, %s226, [#allocation3], 64, 64, 4
        $region32: #{tpu_custom_call.1} parent=11 // pred_fallthru
          _
        // Predicated region
        $region33: #{tpu_custom_call.1} parent=11 // pred_check
          %p232 = pneg %p166
        $region34: #{tpu_custom_call.1} parent=11 // pred_check_branch
          %234 = sbr.rel (%p232) target = $region36
        $region35: #{tpu_custom_call.1} parent=11 // pred_region
          _
        $region36: #{tpu_custom_call.1} parent=11 // pred_fallthru
          _
      $region12: #{tpu_custom_call.1} parent=5 // pred_fallthru
        _
      %p235 = scmp.lt.s32.totalorder %s14, 4
      // Predicated region
      $region37: #{tpu_custom_call.1} parent=5 // pred_check
        %p236 = pneg %p235
      $region38: #{tpu_custom_call.1} parent=5 // pred_check_branch
        %238 = sbr.rel (%p236) target = $region40
      $region39: #{tpu_custom_call.1} parent=5 // pred_region
        // Predicated region
        $region41: #{tpu_custom_call.1} parent=39 // pred_check
          %p239 = pneg %p34
        $region42: #{tpu_custom_call.1} parent=39 // pred_check_branch
          %241 = sbr.rel (%p239) target = $region44
        $region43: #{tpu_custom_call.1} parent=39 // pred_region
          %s242 = smul.u32 2, %s14
          %p243 = scmp.lt.s32.totalorder %s242, 7
          %s244 = scalar_select %p243, %s242, 7
          %s245 = smul.addr %s244, 8
          %s246 = scalar_lea.vmem %s0, %s245
          %s247 = smul.u32 2, %s14
        $region44: #{tpu_custom_call.1} parent=39 // pred_fallthru
          _
      $region40: #{tpu_custom_call.1} parent=5 // pred_fallthru
        _
      %p248 = scmp.le.s32.totalorder 1, %s14
      %p249 = scmp.lt.s32.totalorder %s14, 5
      %p250 = pnand %p248, %p249
      %p251 = pneg %p250
      // Predicated region
      $region45: #{tpu_custom_call.1} parent=5 // pred_check
        _
      $region46: #{tpu_custom_call.1} parent=5 // pred_check_branch
        %253 = sbr.rel (%p250) target = $region48
      $region47: #{tpu_custom_call.1} parent=5 // pred_region
        %s254 = ssub.s32 %s14, 1
        // Predicated region
        $region49: #{tpu_custom_call.1} parent=47 // pred_check
          %p255 = pneg %p145
        $region50: #{tpu_custom_call.1} parent=47 // pred_check_branch
          %257 = sbr.rel (%p255) target = $region52
        $region51: #{tpu_custom_call.1} parent=47 // pred_region
          %258 = dma.done [#allocation3], 1024
        $region52: #{tpu_custom_call.1} parent=47 // pred_fallthru
          _
        %s259 = smul.u32 2, %s19
        %p260 = scmp.lt.s32.totalorder %s259, 7
        %s261 = scalar_select %p260, %s259, 7
        %s262 = smul.addr %s261, 8
        %s263 = scalar_lea.vmem %s0, %s262
        %p264 = pneg %p40
        %p265 = pneg %p37
        %p266 = pneg %p61
        %p267 = pneg %p58
        %p268 = pneg %p82
        %p269 = pneg %p79
        %p270 = pneg %p103
        %p271 = pneg %p100
        %p272 = pneg %p124
        %p273 = pneg %p121
        %p274 = pneg %p145
        %p275 = pneg %p142
        %p276 = pneg %p166
        %p277 = pneg %p163
        %p278 = pneg %p192
        %p279 = pneg %p189
        %s280 = smul.u32 2, %s19
        %p281 = scmp.lt.s32.totalorder %s280, 7
        %s282 = scalar_select %p281, %s280, 7
        %s283 = smul.addr %s282, 8
        %s284 = scalar_lea.vmem %s7, %s283
        %s285 = smul.u32 2, %s19
        %p286 = scmp.lt.s32.totalorder %s285, 7
        %s287 = scalar_select %p286, %s285, 7
        %s288 = smul.addr %s287, 8
        %s289 = scalar_lea.vmem %s0, %s288
        %s290 = smul.u32 2, %s19
        %s291 = smul.u32 2, %s19
        %p292 = scmp.lt.s32.totalorder %s291, 7
        %s293 = scalar_select %p292, %s291, 7
        %s294 = smul.addr %s293, 8
        %s295 = scalar_lea.vmem %s7, %s294
        %s296 = smul.u32 2, %s19
        %v298 = vld [vmem:[%s289] sm:$0xff]
        %v299 = vld [vmem:[%s289 + $0x8] sm:$0xff]
        %v300 = vpack.c.bf16 %v299, %v298
        %v301 = vld [vmem:[%s1] sm:$0xf]
        %v302 = vld [vmem:[%s2] sm:$0x1]
        %v304 = vlaneseq
        %v305 = vshrl.u32 %v304, 7
        %v306 = vsub.s32 0, %v305
        %v307 = vrot.slane %v302, %v306
        %vm309 = vcmask 64512
        %v311 = vsel %vm309, %v300, 0
        %vm313 = vcmask 1043456
        %v315 = vsel %vm313, %v301, 0
        %317 = vmatprep.subr.bf16.mxu0 0
        %318 = vmatpush1.bf16.msra.mxu0 %v315
        %319 = vmatprep.subr.bf16.mxu0 0
        %320 = vmatpush1.bf16.msra.mxu0 0
        %321 = vmatprep.subr.bf16.mxu0 0
        %322 = vmatpush1.bf16.msra.mxu0 0
        %323 = vmatprep.subr.bf16.mxu0 0
        %324 = vmatpush1.bf16.msra.mxu0 0
        %325 = vmatprep.subr.bf16.mxu0 0
        %326 = vmatpush1.bf16.msra.mxu0 0
        %327 = vmatprep.subr.bf16.mxu0 0
        %328 = vmatpush1.bf16.msra.mxu0 0
        %329 = vmatprep.subr.bf16.mxu0 0
        %330 = vmatpush1.bf16.msra.mxu0 0
        %331 = vmatprep.subr.bf16.mxu0 0
        %332 = vmatpush1.bf16.msra.mxu0 0
        %333 = vmatprep.subr.bf16.mxu0 0
        %334 = vmatpush1.bf16.msra.mxu0 0
        %335 = vmatprep.subr.bf16.mxu0 0
        %336 = vmatpush1.bf16.msra.mxu0 0
        %337 = vmatprep.subr.bf16.mxu0 0
        %338 = vmatpush1.bf16.msra.mxu0 0
        %339 = vmatprep.subr.bf16.mxu0 0
        %340 = vmatpush1.bf16.msra.mxu0 0
        %341 = vmatprep.subr.bf16.mxu0 0
        %342 = vmatpush1.bf16.msra.mxu0 0
        %343 = vmatprep.subr.bf16.mxu0 0
        %344 = vmatpush1.bf16.msra.mxu0 0
        %345 = vmatprep.subr.bf16.mxu0 0
        %346 = vmatpush1.bf16.msra.mxu0 0
        %347 = vmatprep.subr.bf16.mxu0 0
        %348 = vmatpush1.bf16.msra.mxu0 0
        %349 = vmatprep.mubr.bf16.mxu0 0
        %350 = vmatmul.mubr.bf16.gmra.mrb[0].mxu0 %v311
        %v351 = vpop.f32.mrb[0].mxu0
        %v352 = vadd.f32 %v307, %v351
        %v353 = vpop.f32.mrb[0].mxu0
        %v354 = vpop.f32.mrb[0].mxu0
        %v355 = vadd.f32 %v307, %v354
        %v356 = vpop.f32.mrb[0].mxu0
        %357 = vdwg.mxu0
        %v358 = vmax.f32 %v352, 0.0
        %v359 = vmax.f32 %v355, 0.0
        %v360 = vpack.c.bf16 %v359, %v358
        %v361 = vld [vmem:[%s3] sm:$0xf]
        %v362 = vld [vmem:[%s3 + $0x4] sm:$0xf]
        %v363 = vld [vmem:[%s3 + $0x8] sm:$0xf]
        %v364 = vld [vmem:[%s3 + $0xc] sm:$0xf]
        %v365 = vld [vmem:[%s3 + $0x10] sm:$0xf]
        %v366 = vld [vmem:[%s3 + $0x14] sm:$0xf]
        %v367 = vld [vmem:[%s3 + $0x18] sm:$0xf]
        %v368 = vld [vmem:[%s3 + $0x1c] sm:$0xf]
        %v369 = vld [vmem:[%s3 + $0x20] sm:$0xf]
        %v370 = vld [vmem:[%s3 + $0x24] sm:$0xf]
        %v371 = vld [vmem:[%s3 + $0x28] sm:$0xf]
        %v372 = vld [vmem:[%s3 + $0x2c] sm:$0xf]
        %v373 = vld [vmem:[%s3 + $0x30] sm:$0xf]
        %v374 = vld [vmem:[%s3 + $0x34] sm:$0xf]
        %v375 = vld [vmem:[%s3 + $0x38] sm:$0xf]
        %v376 = vld [vmem:[%s3 + $0x3c] sm:$0xf]
        %v377 = vld [vmem:[%s4] sm:$0x1]
        %v379 = vlaneseq
        %v380 = vshrl.u32 %v379, 7
        %v381 = vsub.s32 0, %v380
        %v382 = vrot.slane %v377, %v381
        %v400 = vunpack.c.l.b16 %v361
        %v401 = vunpack.c.l.b16 %v362
        %v402 = vunpack.c.l.b16 %v363
        %v403 = vunpack.c.l.b16 %v364
        %v404 = vunpack.c.l.b16 %v365
        %v405 = vunpack.c.l.b16 %v366
        %v406 = vunpack.c.l.b16 %v367
        %v407 = vunpack.c.l.b16 %v368
        %v408 = vunpack.c.l.b16 %v369
        %v409 = vunpack.c.l.b16 %v370
        %v410 = vunpack.c.l.b16 %v371
        %v411 = vunpack.c.l.b16 %v372
        %v412 = vunpack.c.l.b16 %v373
        %v413 = vunpack.c.l.b16 %v374
        %v414 = vunpack.c.l.b16 %v375
        %v415 = vunpack.c.l.b16 %v376
        %v416 = vpack.c.b16 %v401, %v400
        %v417 = vpack.c.b16 %v403, %v402
        %v418 = vpack.c.b16 %v405, %v404
        %v419 = vpack.c.b16 %v407, %v406
        %v420 = vpack.c.b16 %v409, %v408
        %v421 = vpack.c.b16 %v411, %v410
        %v422 = vpack.c.b16 %v413, %v412
        %v423 = vpack.c.b16 %v415, %v414
        %432 = vmatprep.subr.bf16.mxu0 0
        %433 = vmatpush1.bf16.msra.mxu0 %v416
        %434 = vmatprep.subr.bf16.mxu0 0
        %435 = vmatpush1.bf16.msra.mxu0 %v417
        %436 = vmatprep.subr.bf16.mxu0 0
        %437 = vmatpush1.bf16.msra.mxu0 %v418
        %438 = vmatprep.subr.bf16.mxu0 0
        %439 = vmatpush1.bf16.msra.mxu0 %v419
        %440 = vmatprep.subr.bf16.mxu0 0
        %441 = vmatpush1.bf16.msra.mxu0 %v420
        %442 = vmatprep.subr.bf16.mxu0 0
        %443 = vmatpush1.bf16.msra.mxu0 %v421
        %444 = vmatprep.subr.bf16.mxu0 0
        %445 = vmatpush1.bf16.msra.mxu0 %v422
        %446 = vmatprep.subr.bf16.mxu0 0
        %447 = vmatpush1.bf16.msra.mxu0 %v423
        %448 = vmatprep.subr.bf16.mxu0 0
        %449 = vmatpush1.bf16.msra.mxu0 0
        %450 = vmatprep.subr.bf16.mxu0 0
        %451 = vmatpush1.bf16.msra.mxu0 0
        %452 = vmatprep.subr.bf16.mxu0 0
        %453 = vmatpush1.bf16.msra.mxu0 0
        %454 = vmatprep.subr.bf16.mxu0 0
        %455 = vmatpush1.bf16.msra.mxu0 0
        %456 = vmatprep.subr.bf16.mxu0 0
        %457 = vmatpush1.bf16.msra.mxu0 0
        %458 = vmatprep.subr.bf16.mxu0 0
        %459 = vmatpush1.bf16.msra.mxu0 0
        %460 = vmatprep.subr.bf16.mxu0 0
        %461 = vmatpush1.bf16.msra.mxu0 0
        %462 = vmatprep.subr.bf16.mxu0 0
        %463 = vmatpush1.bf16.msra.mxu0 0
        %464 = vmatprep.mubr.bf16.mxu0 0
        %465 = vmatmul.mubr.bf16.gmra.mrb[0].mxu0 %v360
        %v466 = vpop.f32.mrb[0].mxu0
        %v467 = vadd.f32 %v382, %v466
        %v468 = vpop.f32.mrb[0].mxu0
        %v469 = vpop.f32.mrb[0].mxu0
        %v470 = vadd.f32 %v382, %v469
        %v471 = vpop.f32.mrb[0].mxu0
        %472 = vdwg.mxu0
        %v473 = vmax.f32 %v467, 0.0
        %v474 = vmax.f32 %v470, 0.0
        %v475 = vpack.c.bf16 %v474, %v473
        %v476 = vld [vmem:[#allocation2] sm:$0xf]
        %v477 = vld [vmem:[#allocation2 + $0x4] sm:$0xf]
        %v478 = vld [vmem:[#allocation2 + $0x8] sm:$0xf]
        %v479 = vld [vmem:[#allocation2 + $0xc] sm:$0xf]
        %v480 = vld [vmem:[#allocation2 + $0x10] sm:$0xf]
        %v481 = vld [vmem:[#allocation2 + $0x14] sm:$0xf]
        %v482 = vld [vmem:[#allocation2 + $0x18] sm:$0xf]
        %v483 = vld [vmem:[#allocation2 + $0x1c] sm:$0xf]
        %v484 = vld [vmem:[#allocation2 + $0x20] sm:$0xf]
        %v485 = vld [vmem:[#allocation2 + $0x24] sm:$0xf]
        %v486 = vld [vmem:[#allocation2 + $0x28] sm:$0xf]
        %v487 = vld [vmem:[#allocation2 + $0x2c] sm:$0xf]
        %v488 = vld [vmem:[#allocation2 + $0x30] sm:$0xf]
        %v489 = vld [vmem:[#allocation2 + $0x34] sm:$0xf]
        %v490 = vld [vmem:[#allocation2 + $0x38] sm:$0xf]
        %v491 = vld [vmem:[#allocation2 + $0x3c] sm:$0xf]
        %v492 = vld [vmem:[%s6] sm:$0x1]
        %v494 = vlaneseq
        %v495 = vshrl.u32 %v494, 7
        %v496 = vsub.s32 0, %v495
        %v497 = vrot.slane %v492, %v496
        %v515 = vunpack.c.l.b16 %v476
        %v516 = vunpack.c.l.b16 %v477
        %v517 = vunpack.c.l.b16 %v478
        %v518 = vunpack.c.l.b16 %v479
        %v519 = vunpack.c.l.b16 %v480
        %v520 = vunpack.c.l.b16 %v481
        %v521 = vunpack.c.l.b16 %v482
        %v522 = vunpack.c.l.b16 %v483
        %v523 = vunpack.c.l.b16 %v484
        %v524 = vunpack.c.l.b16 %v485
        %v525 = vunpack.c.l.b16 %v486
        %v526 = vunpack.c.l.b16 %v487
        %v527 = vunpack.c.l.b16 %v488
        %v528 = vunpack.c.l.b16 %v489
        %v529 = vunpack.c.l.b16 %v490
        %v530 = vunpack.c.l.b16 %v491
        %v531 = vpack.c.b16 %v516, %v515
        %v532 = vpack.c.b16 %v518, %v517
        %v533 = vpack.c.b16 %v520, %v519
        %v534 = vpack.c.b16 %v522, %v521
        %v535 = vpack.c.b16 %v524, %v523
        %v536 = vpack.c.b16 %v526, %v525
        %v537 = vpack.c.b16 %v528, %v527
        %v538 = vpack.c.b16 %v530, %v529
        %547 = vmatprep.subr.bf16.mxu0 0
        %548 = vmatpush1.bf16.msra.mxu0 %v531
        %549 = vmatprep.subr.bf16.mxu0 0
        %550 = vmatpush1.bf16.msra.mxu0 %v532
        %551 = vmatprep.subr.bf16.mxu0 0
        %552 = vmatpush1.bf16.msra.mxu0 %v533
        %553 = vmatprep.subr.bf16.mxu0 0
        %554 = vmatpush1.bf16.msra.mxu0 %v534
        %555 = vmatprep.subr.bf16.mxu0 0
        %556 = vmatpush1.bf16.msra.mxu0 %v535
        %557 = vmatprep.subr.bf16.mxu0 0
        %558 = vmatpush1.bf16.msra.mxu0 %v536
        %559 = vmatprep.subr.bf16.mxu0 0
        %560 = vmatpush1.bf16.msra.mxu0 %v537
        %561 = vmatprep.subr.bf16.mxu0 0
        %562 = vmatpush1.bf16.msra.mxu0 %v538
        %563 = vmatprep.subr.bf16.mxu0 0
        %564 = vmatpush1.bf16.msra.mxu0 0
        %565 = vmatprep.subr.bf16.mxu0 0
        %566 = vmatpush1.bf16.msra.mxu0 0
        %567 = vmatprep.subr.bf16.mxu0 0
        %568 = vmatpush1.bf16.msra.mxu0 0
        %569 = vmatprep.subr.bf16.mxu0 0
        %570 = vmatpush1.bf16.msra.mxu0 0
        %571 = vmatprep.subr.bf16.mxu0 0
        %572 = vmatpush1.bf16.msra.mxu0 0
        %573 = vmatprep.subr.bf16.mxu0 0
        %574 = vmatpush1.bf16.msra.mxu0 0
        %575 = vmatprep.subr.bf16.mxu0 0
        %576 = vmatpush1.bf16.msra.mxu0 0
        %577 = vmatprep.subr.bf16.mxu0 0
        %578 = vmatpush1.bf16.msra.mxu0 0
        %579 = vmatprep.mubr.bf16.mxu0 0
        %580 = vmatmul.mubr.bf16.gmra.mrb[0].mxu0 %v475
        %v581 = vpop.f32.mrb[0].mxu0
        %v582 = vadd.f32 %v497, %v581
        %v583 = vpop.f32.mrb[0].mxu0
        %v584 = vpop.f32.mrb[0].mxu0
        %v585 = vadd.f32 %v497, %v584
        %v586 = vpop.f32.mrb[0].mxu0
        %587 = vdwg.mxu0
        %vm588 = vcmask 31744
        %589 = vst.msk [vmem:[%s295] sm:$0xff] %vm588, %v582
        %590 = vst.msk [vmem:[%s295 + $0x8] sm:$0xff] %vm588, %v585
        %s591 = smul.u32 2, %s19
        %p592 = scmp.lt.s32.totalorder %s591, 7
        %s593 = scalar_select %p592, %s591, 7
        %s594 = smul.addr %s593, 8
        %s595 = scalar_lea.vmem %s7, %s594
        // Predicated region
        $region53: #{tpu_custom_call.1} parent=47 // pred_check
          %p596 = pneg %p189
        $region54: #{tpu_custom_call.1} parent=47 // pred_check_branch
          %598 = sbr.rel (%p596) target = $region56
        $region55: #{tpu_custom_call.1} parent=47 // pred_region
          %s599 = smul.u32 2, %s19
        $region56: #{tpu_custom_call.1} parent=47 // pred_fallthru
          _
      $region48: #{tpu_custom_call.1} parent=5 // pred_fallthru
        _
      %p600 = scmp.le.s32.totalorder 2, %s14
      // Predicated region
      $region57: #{tpu_custom_call.1} parent=5 // pred_check
        %p601 = pneg %p600
      $region58: #{tpu_custom_call.1} parent=5 // pred_check_branch
        %603 = sbr.rel (%p601) target = $region60
      $region59: #{tpu_custom_call.1} parent=5 // pred_region
        %s604 = ssub.s32 %s14, 2
        // Predicated region
        $region61: #{tpu_custom_call.1} parent=59 // pred_check
          %p605 = pneg %p195
        $region62: #{tpu_custom_call.1} parent=59 // pred_check_branch
          %607 = sbr.rel (%p605) target = $region64
        $region63: #{tpu_custom_call.1} parent=59 // pred_region
          %s608 = smul.u32 2, %s20
          %p609 = scmp.lt.s32.totalorder %s608, 7
          %s610 = scalar_select %p609, %s608, 7
          %s611 = smul.addr %s610, 8
          %s612 = scalar_lea.vmem %s7, %s611
        $region64: #{tpu_custom_call.1} parent=59 // pred_fallthru
          _
      $region60: #{tpu_custom_call.1} parent=5 // pred_fallthru
        _
    $region6: #{tpu_custom_call.1} parent=1 // loop_footer
      %s18 = sadd.s32 1, %s14
    $region7: #{tpu_custom_call.1} parent=1 // loop_footer_branch
      %13 = sbr.rel target = $region3
    $region8: #{tpu_custom_call.1} parent=1 // loop_exit
      _
    %613 = vsyncpa [#allocation3], 1
    %s614 = scalar_lea.sflag [#allocation3], 1
    %615 = vsyncpa %s614, 1

</llo_original>
